<compile_context>
chip_gen: v7x
topology: tpu7x:2x2x1
jax: 0.10.0
libtpu: 0.0.40
codegen_flags: <defaults>
</compile_context>

<pallas_src>
import math

import jax
import jax.numpy as jnp
from jax.experimental import pallas as pl
from jax.experimental.pallas import tpu as pltpu

INV_SQRT2 = 1.0 / math.sqrt(2.0)
_TB = 8192   # batch (sublane) tile: (8192, 48) f32 input tile = 1.5 MiB


def _hadl_kernel(x_ref, w1_ref, b1_ref, w2_ref, b2_ref, out_ref):
    # x tile: (tb, D), natural layout (batch on sublanes, features on lanes).
    h = jnp.dot(x_ref[...], w1_ref[...], preferred_element_type=jnp.float32)
    h = jnp.maximum(h + b1_ref[...], 0.0)                   # (tb, 128) lane-dense
    # Layer 2 (out_features=1): VPU multiply + XLU cross-lane reduce instead of
    # an M=1 MXU matmul that would pad to the full MXU height.
    o = jnp.sum(h * w2_ref[...], axis=-1, keepdims=True)    # (tb, 1)
    out_ref[...] = o + b2_ref[0, 0]


def _fold_weights(params, C, L):
    """Fold Haar filters + both low-rank factor pairs into dense matrices.

    Returns W1 (C*L, 128) whose rows are interleaved so that
    x.reshape(B, C*L) @ W1 == cat(lowpass, highpass).flatten(1) @ A1 @ B1,
    plus b1 as a (1, 128) row, W2 as a (1, 128) row and b2 as a (1, 1) scalar.
    """
    A1, B1, b1, A2, B2, b2 = params
    in_len = L // 2
    W1 = A1 @ B1                                        # (2*C*in_len, 128)
    WL = W1[: C * in_len].reshape(C, in_len, -1)        # rows hit by low-pass feats
    WH = W1[C * in_len:].reshape(C, in_len, -1)         # rows hit by high-pass feats
    We = (WL - WH) * INV_SQRT2                          # multiplies x[..., 0::2]
    Wo = (WL + WH) * INV_SQRT2                          # multiplies x[..., 1::2]
    Wf = jnp.stack([We, Wo], axis=2).reshape(C * L, -1)  # interleaved like x.reshape(B, C*L)
    W2 = A2 @ B2                                        # (128, 1)
    return Wf, b1.reshape(1, -1), W2.reshape(1, -1), b2.reshape(1, 1)


def _hadl_forward_impl(x, params):
    """x: (B, C, L) float32; returns (B, 1) float32 (matches the PyTorch Model)."""
    Bz, C, L = x.shape
    if L % 2 != 0:                                      # F.pad(x, (0, 1))
        x = jnp.pad(x, ((0, 0), (0, 0), (0, 1)))
        L += 1
    D = C * L

    W1, b1r, W2r, b2s = _fold_weights(params, C, L)
    H = W1.shape[1]                                     # 128

    x2 = x.reshape(Bz, D)                               # natural layout, no HBM transpose

    tb = Bz if Bz <= _TB else _TB                       # full block if batch is small
    grid = (pl.cdiv(Bz, tb),)                           # ragged last block handled by Pallas

    cost = pl.CostEstimate(
        flops=2 * Bz * D * H + 3 * Bz * H,
        transcendentals=0,
        bytes_accessed=(Bz * D + D * H + 2 * H + 1 + Bz) * 4,
    )

    out = pl.pallas_call(
        _hadl_kernel,
        out_shape=jax.ShapeDtypeStruct((Bz, 1), jnp.float32),
        grid=grid,
        in_specs=[
            pl.BlockSpec((tb, D), lambda i: (i, 0)),            # x tile (pipelined)
            pl.BlockSpec((D, H), lambda i: (0, 0)),             # fused W1 (resident)
            pl.BlockSpec((1, H), lambda i: (0, 0)),             # b1 row
            pl.BlockSpec((1, H), lambda i: (0, 0)),             # fused W2 row
            pl.BlockSpec(memory_space=pltpu.MemorySpace.SMEM),  # scalar b2
        ],
        out_specs=pl.BlockSpec((tb, 1), lambda i: (i, 0)),
        compiler_params=pltpu.CompilerParams(
            dimension_semantics=("parallel",),
            vmem_limit_bytes=32 * 1024 * 1024),
        cost_estimate=cost,
    )(x2, W1, b1r, W2r, b2s)
    return out


# One dispatch; fold + pad + pallas_call all fuse.  For repeated inference with
# fixed params, precompute _fold_weights once and jit only the apply.
hadl_forward = jax.jit(_hadl_forward_impl)


def _orthogonal(key, shape):
    """Deterministic stand-in for nn.init.orthogonal_."""
    rows, cols = shape
    if rows >= cols:
        a = jax.random.normal(key, (rows, cols), dtype=jnp.float32)
        q, _ = jnp.linalg.qr(a)
        return q[:, :cols]
    else:
        a = jax.random.normal(key, (cols, rows), dtype=jnp.float32)
        q, _ = jnp.linalg.qr(a)
        return q[:, :rows].T


def make_params(key, in_len, enc_in):
    d_in = in_len * 2 * enc_in            # == in_len * 6 when enc_in == 3
    k = jax.random.split(key, 6)
    A1 = _orthogonal(k[0], (d_in, 30))
    B1 = _orthogonal(k[1], (30, 128))
    b1 = jax.random.uniform(k[2], (128,), dtype=jnp.float32)
    A2 = _orthogonal(k[3], (128, 15))
    B2 = _orthogonal(k[4], (15, 1))
    b2 = jax.random.uniform(k[5], (1,), dtype=jnp.float32)
    return (A1, B1, b1, A2, B2, b2)


def ref_forward(x, params):
    """Pure-JAX reference matching the PyTorch forward exactly."""
    A1, B1, b1, A2, B2, b2 = params
    B, C, L = x.shape
    if L % 2 != 0:
        x = jnp.pad(x, ((0, 0), (0, 0), (0, 1)))
    xr = x.reshape(B, C, -1, 2)
    low = (xr[..., 0] + xr[..., 1]) * INV_SQRT2
    high = (xr[..., 1] - xr[..., 0]) * INV_SQRT2
    feat = jnp.concatenate([low, high], axis=1)         # (B, 2C, in_len)
    flat = feat.reshape(B, -1)
    h = jnp.maximum(flat @ A1 @ B1 + b1, 0.0)
    return h @ A2 @ B2 + b2


if __name__ == "__main__":
    seq_len = 16      # even -> no padding branch; in_len = 8
    enc_in = 3        # required by LowRank(in_len * 6, ...)
    batch = 2

    key = jax.random.PRNGKey(0)
    kx, kp = jax.random.split(key)
    x = jax.random.normal(kx, (batch, enc_in, seq_len), dtype=jnp.float32)
    params = make_params(kp, seq_len // 2, enc_in)

    out = hadl_forward(x, params)
    out = jax.block_until_ready(out)

    ref = ref_forward(x, params)
    assert out.shape == (batch, 1), out.shape
    assert jnp.allclose(out, ref, atol=1e-4, rtol=1e-4), (out, ref)
    print("KERNEL_OK")
</pallas_src>

<mosaic_0001>
module attributes {stable_mosaic.version = 11 : i64} {
  func.func @_hadl_kernel(%arg0: i32, %arg1: memref<2x48xf32, #tpu.memory_space<vmem>>, %arg2: memref<48x128xf32, #tpu.memory_space<vmem>>, %arg3: memref<1x128xf32, #tpu.memory_space<vmem>>, %arg4: memref<1x128xf32, #tpu.memory_space<vmem>>, %arg5: memref<1x1xf32, #tpu.memory_space<smem>>, %arg6: memref<2x1xf32, #tpu.memory_space<vmem>>) attributes {dimension_semantics = [#tpu.dimension_semantics<parallel>], iteration_bounds = array<i64: 1>, scalar_prefetch = 0 : i64, scratch_operands = 0 : i64, tpu.core_type = #tpu.core_type<tc>, window_params = [{transform_indices = @transform_0, window_bounds = array<i64: 2, 48>}, {pipeline_mode = #tpu.pipeline_mode<synchronous>, transform_indices = @transform_1, window_bounds = array<i64: 48, 128>}, {pipeline_mode = #tpu.pipeline_mode<synchronous>, transform_indices = @transform_2, window_bounds = array<i64: 1, 128>}, {pipeline_mode = #tpu.pipeline_mode<synchronous>, transform_indices = @transform_3, window_bounds = array<i64: 1, 128>}, {transform_indices = @transform_4, window_bounds = array<i64: 1, 1>}, {transform_indices = @transform_5, window_bounds = array<i64: 2, 1>}]} {
    %c0 = arith.constant 0 : index
    %c0_0 = arith.constant 0 : index
    %0 = vector.load %arg1[%c0, %c0_0] : memref<2x48xf32, #tpu.memory_space<vmem>>, vector<2x48xf32>
    %c0_1 = arith.constant 0 : index
    %c0_2 = arith.constant 0 : index
    %1 = vector.load %arg2[%c0_1, %c0_2] : memref<48x128xf32, #tpu.memory_space<vmem>>, vector<48x128xf32>
    %cst = arith.constant dense<0.000000e+00> : vector<2x128xf32>
    %2 = tpu.matmul %0, %1, %cst {dimension_numbers = #tpu.dot_dimension_numbers<[1], [0], [0], [1], [0, 0, 1, 1], [], []>} : vector<2x48xf32>, vector<48x128xf32>, vector<2x128xf32> -> vector<2x128xf32>
    %c0_3 = arith.constant 0 : index
    %c0_4 = arith.constant 0 : index
    %3 = vector.load %arg3[%c0_3, %c0_4] : memref<1x128xf32, #tpu.memory_space<vmem>>, vector<1x128xf32>
    %4 = vector.broadcast %3 : vector<1x128xf32> to vector<2x128xf32>
    %5 = arith.addf %2, %4 : vector<2x128xf32>
    %cst_5 = arith.constant 0.000000e+00 : f32
    %6 = vector.broadcast %cst_5 : f32 to vector<2x128xf32>
    %7 = arith.maximumf %5, %6 : vector<2x128xf32>
    %c0_6 = arith.constant 0 : index
    %c0_7 = arith.constant 0 : index
    %8 = vector.load %arg4[%c0_6, %c0_7] : memref<1x128xf32, #tpu.memory_space<vmem>>, vector<1x128xf32>
    %9 = vector.broadcast %8 : vector<1x128xf32> to vector<2x128xf32>
    %10 = arith.mulf %7, %9 : vector<2x128xf32>
    %cst_8 = arith.constant dense<0.000000e+00> : vector<2xf32>
    %11 = vector.multi_reduction <add>, %10, %cst_8 [1] : vector<2x128xf32> to vector<2xf32>
    %12 = vector.shape_cast %11 : vector<2xf32> to vector<2x1xf32>
    %c0_9 = arith.constant 0 : index
    %c0_10 = arith.constant 0 : index
    %13 = memref.load %arg5[%c0_9, %c0_10] : memref<1x1xf32, #tpu.memory_space<smem>>
    %14 = vector.broadcast %13 : f32 to vector<2x1xf32>
    %15 = arith.addf %12, %14 : vector<2x1xf32>
    %c0_11 = arith.constant 0 : index
    %c0_12 = arith.constant 0 : index
    %16 = vector.load %arg6[%c0_11, %c0_12] : memref<2x1xf32, #tpu.memory_space<vmem>>, vector<2x1xf32>
    tpu.vector_store %arg6[%c0_11, %c0_12], %15 {strides = array<i32>} : memref<2x1xf32, #tpu.memory_space<vmem>>, vector<2x1xf32>,
    return
  }
  func.func @transform_0(%arg0: i32) -> (i32, i32) {
    %c0_i32 = arith.constant 0 : i32
    %c0_i32_0 = arith.constant 0 : i32
    return %arg0, %c0_i32 : i32, i32
  }
  func.func @transform_1(%arg0: i32) -> (i32, i32) {
    %c0_i32 = arith.constant 0 : i32
    %c0_i32_0 = arith.constant 0 : i32
    %c0_i32_1 = arith.constant 0 : i32
    return %c0_i32, %c0_i32_0 : i32, i32
  }
  func.func @transform_2(%arg0: i32) -> (i32, i32) {
    %c0_i32 = arith.constant 0 : i32
    %c0_i32_0 = arith.constant 0 : i32
    %c0_i32_1 = arith.constant 0 : i32
    return %c0_i32, %c0_i32_0 : i32, i32
  }
  func.func @transform_3(%arg0: i32) -> (i32, i32) {
    %c0_i32 = arith.constant 0 : i32
    %c0_i32_0 = arith.constant 0 : i32
    %c0_i32_1 = arith.constant 0 : i32
    return %c0_i32, %c0_i32_0 : i32, i32
  }
  func.func @transform_4(%arg0: i32) -> (i32, i32) {
    %c0_i32 = arith.constant 0 : i32
    %c0_i32_0 = arith.constant 0 : i32
    %c0_i32_1 = arith.constant 0 : i32
    return %c0_i32, %c0_i32_0 : i32, i32
  }
  func.func @transform_5(%arg0: i32) -> (i32, i32) {
    %c0_i32 = arith.constant 0 : i32
    %c0_i32_0 = arith.constant 0 : i32
    return %arg0, %c0_i32 : i32, i32
  }
}

</mosaic_0001>

<llo_original>
// kernel: _hadl_forward_impl.1
$region0: #{_hadl_forward_impl.1}
  #allocation0 [shape = 'u32[]', space=smem, size = 0x4, offset = 0x4, fixed_abs, tag = 'smem constant byte address 0x4 - core index']
  #allocation1 [shape = 'u32[144,128]{1,0:T(1,128)}', space=vmem, size = 0x12000, scoped, tag = 'internal scratch']
  #allocation2 [shape = 'f32[1,1]{1,0:T(1,128)S(6)}', space=smem, size = 0x200, scoped, tag = 'scoped memory for _hadl_forward_impl.1']
  %s0 = inlined_call_operand.vmem [shape: f32[2,48], index: 0, kind: input, shape index: {}]
  %s1 = inlined_call_operand.vmem [shape: f32[48,128], index: 1, kind: input, shape index: {}]
  %s2 = inlined_call_operand.vmem [shape: f32[1,128], index: 2, kind: input, shape index: {}]
  %s3 = inlined_call_operand.vmem [shape: f32[1,128], index: 3, kind: input, shape index: {}]
  %s4 = inlined_call_operand.<no memory space> [shape: f32[1,1], index: 4, kind: input, shape index: {}]
  %s5 = inlined_call_operand.vmem [shape: f32[2,1], index: 5, kind: output, shape index: {}]
  %s6 = sld [smem:[#allocation0]]
  $region30: #{_hadl_forward_impl.1} parent=0
    _
  %s8 = ssub.s32 1, %s6
  %s9 = scalar_select 0, %s8, %s6
  %10 = sst [smem:[#allocation2]] %s4
  // Predicated region
  $region2: #{_hadl_forward_impl.1} parent=0 // pred_check
    _
  $region3: #{_hadl_forward_impl.1} parent=0 // pred_check_branch
    %12 = sbr.rel (0) target = $region5
  $region4: #{_hadl_forward_impl.1} parent=0 // pred_region
    _
  $region5: #{_hadl_forward_impl.1} parent=0 // pred_fallthru
    _
  // Predicated region
  $region6: #{_hadl_forward_impl.1} parent=0 // pred_check
    _
  $region7: #{_hadl_forward_impl.1} parent=0 // pred_check_branch
    %14 = sbr.rel (0) target = $region9
  $region8: #{_hadl_forward_impl.1} parent=0 // pred_region
    _
  $region9: #{_hadl_forward_impl.1} parent=0 // pred_fallthru
    _
  // Predicated region
  $region10: #{_hadl_forward_impl.1} parent=0 // pred_check
    _
  $region11: #{_hadl_forward_impl.1} parent=0 // pred_check_branch
    %16 = sbr.rel (0) target = $region13
  $region12: #{_hadl_forward_impl.1} parent=0 // pred_region
    _
  $region13: #{_hadl_forward_impl.1} parent=0 // pred_fallthru
    _
  // Predicated region
  $region14: #{_hadl_forward_impl.1} parent=0 // pred_check
    _
  $region15: #{_hadl_forward_impl.1} parent=0 // pred_check_branch
    %18 = sbr.rel (0) target = $region17
  $region16: #{_hadl_forward_impl.1} parent=0 // pred_region
    _
  $region17: #{_hadl_forward_impl.1} parent=0 // pred_fallthru
    _
  // Predicated region
  $region18: #{_hadl_forward_impl.1} parent=0 // pred_check
    _
  $region19: #{_hadl_forward_impl.1} parent=0 // pred_check_branch
    %20 = sbr.rel (0) target = $region21
  $region20: #{_hadl_forward_impl.1} parent=0 // pred_region
    _
  $region21: #{_hadl_forward_impl.1} parent=0 // pred_fallthru
    _
  %v21 = vld [vmem:[%s0] sm:$0x3]
  %v22 = vld [vmem:[%s1] sm:$0xff]
  %v23 = vld [vmem:[%s1 + $0x8] sm:$0xff]
  %v24 = vld [vmem:[%s1 + $0x10] sm:$0xff]
  %v25 = vld [vmem:[%s1 + $0x18] sm:$0xff]
  %v26 = vld [vmem:[%s1 + $0x20] sm:$0xff]
  %v27 = vld [vmem:[%s1 + $0x28] sm:$0xff]
  %v28 = vld [vmem:[%s2] sm:$0x1]
  %v30 = vlaneseq
  %v31 = vshrl.u32 %v30, 7
  %v32 = vsub.s32 0, %v31
  %v33 = vrot.slane %v28, %v32
  %vm35 = vcmask 392192
  %v37 = vsel %vm35, %v21, 0
  %39 = vmatprep.subr.mxu0 0.0
  %40 = vmatpush1.msra.mxu0 %v22
  %41 = vmatprep.subr.mxu0 0.0
  %42 = vmatpush1.msra.mxu0 %v23
  %43 = vmatprep.subr.mxu0 0.0
  %44 = vmatpush1.msra.mxu0 %v24
  %45 = vmatprep.subr.mxu0 0.0
  %46 = vmatpush1.msra.mxu0 %v25
  %47 = vmatprep.subr.mxu0 0.0
  %48 = vmatpush1.msra.mxu0 %v26
  %49 = vmatprep.subr.mxu0 0.0
  %50 = vmatpush1.msra.mxu0 %v27
  %51 = vmatprep.subr.mxu0 0.0
  %52 = vmatpush1.msra.mxu0 0.0
  %53 = vmatprep.subr.mxu0 0.0
  %54 = vmatpush1.msra.mxu0 0.0
  %55 = vmatprep.subr.mxu0 0.0
  %56 = vmatpush1.msra.mxu0 0.0
  %57 = vmatprep.subr.mxu0 0.0
  %58 = vmatpush1.msra.mxu0 0.0
  %59 = vmatprep.subr.mxu0 0.0
  %60 = vmatpush1.msra.mxu0 0.0
  %61 = vmatprep.subr.mxu0 0.0
  %62 = vmatpush1.msra.mxu0 0.0
  %63 = vmatprep.subr.mxu0 0.0
  %64 = vmatpush1.msra.mxu0 0.0
  %65 = vmatprep.subr.mxu0 0.0
  %66 = vmatpush1.msra.mxu0 0.0
  %67 = vmatprep.subr.mxu0 0.0
  %68 = vmatpush1.msra.mxu0 0.0
  %69 = vmatprep.subr.mxu0 0.0
  %70 = vmatpush1.msra.mxu0 0.0
  %71 = vmatprep.subr.mxu0 0.0
  %72 = vmatpush1.msra.mxu0 0.0
  %73 = vmatprep.subr.mxu0 0.0
  %74 = vmatpush1.msra.mxu0 0.0
  %75 = vmatprep.subr.mxu0 0.0
  %76 = vmatpush1.msra.mxu0 0.0
  %77 = vmatprep.subr.mxu0 0.0
  %78 = vmatpush1.msra.mxu0 0.0
  %79 = vmatprep.subr.mxu0 0.0
  %80 = vmatpush1.msra.mxu0 0.0
  %81 = vmatprep.subr.mxu0 0.0
  %82 = vmatpush1.msra.mxu0 0.0
  %83 = vmatprep.subr.mxu0 0.0
  %84 = vmatpush1.msra.mxu0 0.0
  %85 = vmatprep.subr.mxu0 0.0
  %86 = vmatpush1.msra.mxu0 0.0
  %87 = vmatprep.subr.mxu0 0.0
  %88 = vmatpush1.msra.mxu0 0.0
  %89 = vmatprep.subr.mxu0 0.0
  %90 = vmatpush1.msra.mxu0 0.0
  %91 = vmatprep.subr.mxu0 0.0
  %92 = vmatpush1.msra.mxu0 0.0
  %93 = vmatprep.subr.mxu0 0.0
  %94 = vmatpush1.msra.mxu0 0.0
  %95 = vmatprep.subr.mxu0 0.0
  %96 = vmatpush1.msra.mxu0 0.0
  %97 = vmatprep.subr.mxu0 0.0
  %98 = vmatpush1.msra.mxu0 0.0
  %99 = vmatprep.subr.mxu0 0.0
  %100 = vmatpush1.msra.mxu0 0.0
  %101 = vmatprep.subr.mxu0 0.0
  %102 = vmatpush1.msra.mxu0 0.0
  %103 = vmatprep.mubr.f32.mxu0 0.0
  %104 = vmatmul.mubr.f32.gmra.mrb[0].mxu0 %v37
  %v105 = vpop.f32.mrb[0].mxu0
  %v106 = vadd.f32 %v33, %v105
  %v107 = vpop.f32.mrb[0].mxu0
  %108 = vdwg.mxu0
  %v109 = vmax.f32 %v106, 0.0
  %v110 = vld [vmem:[%s3] sm:$0x1]
  %v112 = vlaneseq
  %v113 = vshrl.u32 %v112, 7
  %v114 = vsub.s32 0, %v113
  %v115 = vrot.slane %v110, %v114
  %v117 = vmul.f32 %v109, %v115
  %vm118 = vcmask 1041408
  %v119 = vsel %vm118, %v117, 0.0
  %120 = vadd.xlane.f32.xlu0 %v119
  %v121 = vpop.xlane.xlu0 %120
  %s122 = sld [smem:[#allocation2]]
  %v123 = vstv %s122
  %v124 = vadd.f32 %v121, %v123
  %vm125 = vcmask 1024
  %126 = vst.msk [vmem:[%s5] sm:$0x3] %vm125, %v124
  // Predicated region
  $region22: #{_hadl_forward_impl.1} parent=0 // pred_check
    _
  $region23: #{_hadl_forward_impl.1} parent=0 // pred_check_branch
    %128 = sbr.rel (0) target = $region25
  $region24: #{_hadl_forward_impl.1} parent=0 // pred_region
    _
  $region25: #{_hadl_forward_impl.1} parent=0 // pred_fallthru
    _
  // Predicated region
  $region26: #{_hadl_forward_impl.1} parent=0 // pred_check
    _
  $region27: #{_hadl_forward_impl.1} parent=0 // pred_check_branch
    %130 = sbr.rel (0) target = $region29
  $region28: #{_hadl_forward_impl.1} parent=0 // pred_region
    _
  $region29: #{_hadl_forward_impl.1} parent=0 // pred_fallthru
    _

</llo_original>
